<compile_context>
chip_gen: v6e
topology: v6e:2x2x1
jax: 0.10.0
libtpu: 0.0.40
codegen_flags: <defaults>
</compile_context>

<pallas_src>
import functools
import math

import jax
import jax.numpy as jnp
from jax.experimental import pallas as pl
from jax.experimental.pallas import tpu as pltpu


def _choose_tx(C: int, X: int, itemsize: int, n_bufs: int) -> int:
    """Lane-dense X tile: multiple of 128 (or all of X when X <= 128), sized so
    that `n_bufs` live (C, tx) VMEM buffers stay within a ~12 MiB budget."""
    if X <= 128:
        return X  # block dim equal to the full array dim is always legal
    # TODO(synk): also tile the channel axis for extremely large C (where even
    # a 128-lane tile would exceed the VMEM budget).
    budget = 12 * 1024 * 1024
    per_lane = max(1, C * itemsize * n_bufs)
    max_tx = max(128, (budget // per_lane) // 128 * 128)
    tx = min(max_tx, (X // 128) * 128)
    # Keep at least two X tiles so the "parallel" grid axis can shard across
    # v7x's two TensorCores; negligible cost on single-TC v5e/v6e.
    if X >= 256:
        tx = min(tx, max(128, (X // 2) // 128 * 128))
    return tx


def _penc_copy_kernel(enc_ref, o_ref):
    """B <= 2 path: pure broadcast copy of the precomputed (C, TX) table."""
    o_ref[...] = enc_ref[...][None]


def _penc_compute_kernel(const_ref, o_ref, enc_ref, *, tx: int):
    """B >= 3 path.  grid = (num_x_tiles, B); batch axis is innermost/sequential.

    enc_ref is (C, TX) VMEM scratch holding the batch-invariant encoding for
    the current X tile: computed once at b == 0, copied out for b >= 1.
    """
    # NOTE: program_id must be read at kernel top level (never inside pl.when).
    b = pl.program_id(1)
    x0 = pl.program_id(0) * tx

    @pl.when(b == 0)
    def _():
        C, TX = enc_ref.shape
        pos = (jax.lax.broadcasted_iota(jnp.int32, (1, TX), 1) + x0).astype(
            jnp.float32
        )
        consts = const_ref[...]            # (C, 2)
        inv_freq = consts[:, 0:1]          # (C, 1)
        phase = consts[:, 1:2]             # (C, 1): 0 (even ch) or pi/2 (odd ch)
        # cos(a) == sin(a + pi/2): a single transcendental per element.
        # TODO(synk): for extremely long X (p * inv_freq ~ 1e5) f32 range
        # reduction makes this drift slightly from an explicit cos.
        val = jnp.sin(pos * inv_freq + phase).astype(o_ref.dtype)
        enc_ref[...] = val
        o_ref[...] = val[None]             # write straight from registers

    @pl.when(b > 0)
    def _():
        # Steady state: pure VMEM -> HBM writeback, no compute.
        o_ref[...] = enc_ref[...][None]


def positional_encoding_permute_1d(x: jax.Array) -> jax.Array:
    """Equivalent of PositionalEncodingPermute1D(C)(x) for x of shape (B, C, X)."""
    B, C, X = x.shape
    padded = int(math.ceil(C / 2) * 2)
    itemsize = jnp.dtype(x.dtype).itemsize

    inv_freq_half = 1.0 / (
        10000.0 ** (jnp.arange(0, padded, 2, dtype=jnp.float32) / padded)
    )  # (padded//2,)

    compiler_params = pltpu.CompilerParams(
        dimension_semantics=("parallel", "arbitrary"),
        vmem_limit_bytes=32 * 1024 * 1024,
    )

    if B <= 2:
        # Precompute the tiny (C, X) batch-invariant table (exact sin/cos) and
        # make the kernel a lane-dense broadcast copy.
        pos = jnp.arange(X, dtype=jnp.float32)
        sin_inp = pos[:, None] * inv_freq_half[None, :]              # (X, padded//2)
        emb = jnp.stack(
            (jnp.sin(sin_inp), jnp.cos(sin_inp)), axis=-1
        ).reshape(X, padded)
        enc_cx = jnp.transpose(emb[:, :C]).astype(x.dtype)           # (C, X)

        tx = _choose_tx(C, X, itemsize, n_bufs=4)  # 2x in bufs + 2x out bufs
        return pl.pallas_call(
            _penc_copy_kernel,
            out_shape=jax.ShapeDtypeStruct((B, C, X), x.dtype),
            grid=(pl.cdiv(X, tx), B),
            in_specs=[pl.BlockSpec((C, tx), lambda j, b: (0, j))],
            out_specs=pl.BlockSpec((1, C, tx), lambda j, b: (b, 0, j)),
            compiler_params=compiler_params,
        )(enc_cx)

    # B >= 3: compute the encoding once per X tile inside the kernel
    # (amortized over B output writes); no extra HBM traffic.
    inv_freq_c = jnp.repeat(inv_freq_half, 2)[:C]                    # (C,)
    phase_c = (jnp.arange(C, dtype=jnp.float32) % 2.0) * (math.pi / 2.0)
    const_c2 = jnp.stack((inv_freq_c, phase_c), axis=1)              # (C, 2)

    tx = _choose_tx(C, X, itemsize, n_bufs=3)  # 2x out bufs + 1x scratch
    kernel = functools.partial(_penc_compute_kernel, tx=tx)
    return pl.pallas_call(
        kernel,
        out_shape=jax.ShapeDtypeStruct((B, C, X), x.dtype),
        grid=(pl.cdiv(X, tx), B),
        in_specs=[pl.BlockSpec((C, 2), lambda j, b: (0, 0))],
        out_specs=pl.BlockSpec((1, C, tx), lambda j, b: (b, 0, j)),
        scratch_shapes=[pltpu.VMEM((C, tx), x.dtype)],
        compiler_params=compiler_params,
    )(const_c2)


def _reference(x: jax.Array) -> jax.Array:
    """Pure-JAX reference mirroring the PyTorch code path exactly."""
    B, C, X = x.shape
    padded = int(math.ceil(C / 2) * 2)
    inv_freq = 1.0 / (
        10000.0 ** (jnp.arange(0, padded, 2, dtype=jnp.float32) / padded)
    )
    pos = jnp.arange(X, dtype=jnp.float32)
    sin_inp = jnp.einsum("i,j->ij", pos, inv_freq)                   # (X, padded//2)
    emb = jnp.stack((jnp.sin(sin_inp), jnp.cos(sin_inp)), axis=-1)   # (X, padded//2, 2)
    emb = emb.reshape(X, padded)[:, :C]                              # (X, C)
    enc = jnp.broadcast_to(emb[None], (B, X, C)).astype(x.dtype)     # (B, X, C)
    return jnp.transpose(enc, (0, 2, 1))                             # (B, C, X)


def _check(B, C, X, dtype, atol):
    key = jax.random.PRNGKey(0)
    x = jax.random.normal(key, (B, C, X), dtype=jnp.float32).astype(dtype)
    out = jax.block_until_ready(positional_encoding_permute_1d(x))
    ref = _reference(x)
    assert out.shape == (B, C, X) and out.dtype == x.dtype
    err = float(
        jnp.max(jnp.abs(out.astype(jnp.float32) - ref.astype(jnp.float32)))
    )
    assert err <= atol, (B, C, X, str(dtype), err)


if __name__ == "__main__":
    # Small NCX shape: copy path (B <= 2), single tile, X < 128.
    _check(2, 4, 16, jnp.float32, 1e-5)
    # Compute path (B >= 3), two lane-dense X tiles.
    _check(3, 8, 256, jnp.float32, 1e-4)
    # Compute path, odd C and X not a multiple of 128 (partial last block).
    _check(4, 5, 200, jnp.float32, 1e-4)
    # Copy path, bf16 cast, partial last block.
    _check(2, 6, 300, jnp.bfloat16, 2e-2)
    print("KERNEL_OK")
</pallas_src>

<mosaic_0001>
module attributes {stable_mosaic.version = 11 : i64} {
  func.func @_penc_copy_kernel(%arg0: i32, %arg1: i32, %arg2: memref<4x16xf32, #tpu.memory_space<vmem>>, %arg3: memref<1x4x16xf32, #tpu.memory_space<vmem>>) attributes {dimension_semantics = [#tpu.dimension_semantics<parallel>, #tpu.dimension_semantics<arbitrary>], iteration_bounds = array<i64: 1, 2>, scalar_prefetch = 0 : i64, scratch_operands = 0 : i64, tpu.core_type = #tpu.core_type<tc>, window_params = [{transform_indices = @transform_0, window_bounds = array<i64: 4, 16>}, {transform_indices = @transform_1, window_bounds = array<i64: 1, 4, 16>}]} {
    %c0 = arith.constant 0 : index
    %c0_0 = arith.constant 0 : index
    %0 = vector.load %arg2[%c0, %c0_0] : memref<4x16xf32, #tpu.memory_space<vmem>>, vector<4x16xf32>
    %1 = vector.shape_cast %0 : vector<4x16xf32> to vector<1x4x16xf32>
    %c0_1 = arith.constant 0 : index
    %c0_2 = arith.constant 0 : index
    %c0_3 = arith.constant 0 : index
    %2 = vector.load %arg3[%c0_1, %c0_2, %c0_3] : memref<1x4x16xf32, #tpu.memory_space<vmem>>, vector<1x4x16xf32>
    tpu.vector_store %arg3[%c0_1, %c0_2, %c0_3], %1 {strides = array<i32>} : memref<1x4x16xf32, #tpu.memory_space<vmem>>, vector<1x4x16xf32>,
    return
  }
  func.func @transform_0(%arg0: i32, %arg1: i32) -> (i32, i32) {
    %c0_i32 = arith.constant 0 : i32
    %c0_i32_0 = arith.constant 0 : i32
    return %c0_i32, %arg0 : i32, i32
  }
  func.func @transform_1(%arg0: i32, %arg1: i32) -> (i32, i32, i32) {
    %c0_i32 = arith.constant 0 : i32
    %c0_i32_0 = arith.constant 0 : i32
    return %arg1, %c0_i32, %arg0 : i32, i32, i32
  }
}

</mosaic_0001>

<llo_original>
// kernel: tpu_custom_call.1
$region0: #{tpu_custom_call.1}
  #allocation0 [shape = 'u32[]', space=smem, size = 0x4, offset = 0x4, fixed_abs, tag = 'smem constant byte address 0x4 - core index']
  #allocation1 [shape = 'u32[144,128]{1,0:T(1,128)}', space=vmem, size = 0x12000, scoped, tag = 'internal scratch']
  %s0 = inlined_call_operand.hbm [shape: f32[4,16], index: 0, kind: input, shape index: {}]
  %s1 = inlined_call_operand.hbm [shape: f32[2,4,16], index: 1, kind: output, shape index: {}]
  %s2 = sld [smem:[#allocation0]]
  $region41: #{tpu_custom_call.1} parent=0
    _
  %s4 = ssub.s32 1, %s2
  %s5 = scalar_select 0, %s4, %s2
  $region1: #{tpu_custom_call.1} parent=0
    #allocation2 [shape = 'u8[2048]{0}', space=vmem, size = 0x800, scoped, tag = 'input window, operand 0, single buffered']
    #allocation3 [shape = 's32[2]{0}', space=sflag, size = 0x8, scoped, tag = 'scoped memory for tpu_custom_call.1']
    #allocation4 [shape = 's32[2]{0}', space=sflag, size = 0x8, scoped, tag = 'scoped memory for tpu_custom_call.1']
    #allocation5 [shape = 'u8[4096]{0}', space=vmem, size = 0x1000, scoped, tag = 'output window, operand 0']
    %6 = vsyncpa [#allocation3], 0
    %7 = vsyncpa [#allocation4], 0
    %s8 = scalar_lea.sflag [#allocation4], 1
    %9 = vsyncpa %s8, 0
    loop: start=0, step=1, limit=4
    $region2: #{tpu_custom_call.1} parent=1 // loop_pre_header
      _
    $region3: #{tpu_custom_call.1} parent=1 // loop_header
      %s11 = sphi 0, %s15
      %p12 = scmp.ge.s32.totalorder %s11, 4
      %s18 = sphi 0, %s30
      %s19 = sphi 0, %s26
      %s20 = sphi 0, %s18
      %s21 = sphi 0, %s19
      %s22 = sphi 0, %s20
      %s23 = sphi 0, %s21
      %s33 = sphi 0, %s35
      %s36 = sphi 0, %s33
      %s37 = sphi 0, %s36
      %s53 = sphi 0, %s37
      %s61 = sphi 0, %s63
      %s64 = sphi 0, %s61
      %s65 = sphi 0, %s64
      %s81 = sphi 0, %s65
    $region4: #{tpu_custom_call.1} parent=1 // loop_header_branch
      %14 = sbr.rel (%p12) target = $region8
    $region5: #{tpu_custom_call.1} parent=1 // loop_body
      %s16 = ssub.s32 %s11, 1
      %s17 = ssub.s32 %s11, 2
      %s24 = sadd.s32 1, %s19
      %p25 = scmp.ge.s32.totalorder %s24, 2
      %s26 = scalar_select %p25, 0, %s24
      %s27 = sadd.s32 1, %s18
      %s28 = scalar_select %p25, %s27, %s18
      %p29 = scmp.ge.s32.totalorder %s28, 1
      %s30 = scalar_select %p29, 0, %s28
      %s31 = ssub.s32 %s18, %s30
      %p32 = scmp.eq.s32.totalorder %s31, 0
      %s34 = sadd.s32 %s33, 1
      %s35 = scalar_select %p32, %s33, %s34
      %p38 = pneg %p32
      %p39 = scmp.eq.s32.totalorder %s11, 1
      %p40 = por %p38, %p39
      %p41 = scmp.ne.s32.totalorder %s33, %s36
      %p42 = scmp.eq.s32.totalorder %s11, 0
      %p43 = por %p41, %p42
      %p44 = scmp.ne.s32.totalorder %s33, %s36
      %p45 = scmp.eq.s32.totalorder %s16, 1
      %p46 = por %p44, %p45
      %p47 = scmp.ne.s32.totalorder %s36, %s37
      %p48 = scmp.eq.s32.totalorder %s16, 0
      %p49 = por %p47, %p48
      %p50 = scmp.ne.s32.totalorder %s36, %s37
      %p51 = scmp.eq.s32.totalorder %s17, 1
      %p52 = por %p50, %p51
      %p54 = scmp.ne.s32.totalorder %s37, %s53
      %p55 = scmp.eq.s32.totalorder %s17, 0
      %p56 = por %p54, %p55
      %s57 = ssub.s32 %s19, %s26
      %s58 = ssub.s32 %s18, %s30
      %s59 = sor.u32 %s57, %s58
      %p60 = scmp.eq.s32.totalorder %s59, 0
      %s62 = sadd.s32 %s61, 1
      %s63 = scalar_select %p60, %s61, %s62
      %p66 = pneg %p60
      %p67 = scmp.eq.s32.totalorder %s11, 1
      %p68 = por %p66, %p67
      %p69 = scmp.ne.s32.totalorder %s61, %s64
      %p70 = scmp.eq.s32.totalorder %s11, 0
      %p71 = por %p69, %p70
      %p72 = scmp.ne.s32.totalorder %s61, %s64
      %p73 = scmp.eq.s32.totalorder %s16, 1
      %p74 = por %p72, %p73
      %p75 = scmp.ne.s32.totalorder %s64, %s65
      %p76 = scmp.eq.s32.totalorder %s16, 0
      %p77 = por %p75, %p76
      %p78 = scmp.ne.s32.totalorder %s64, %s65
      %p79 = scmp.eq.s32.totalorder %s17, 1
      %p80 = por %p78, %p79
      %p82 = scmp.ne.s32.totalorder %s65, %s81
      %p83 = scmp.eq.s32.totalorder %s17, 0
      %p84 = por %p82, %p83
      %p85 = scmp.le.s32.totalorder 1, %s11
      %p86 = scmp.lt.s32.totalorder %s11, 3
      %p87 = pnand %p85, %p86
      %p88 = pneg %p87
      // Predicated region
      $region9: #{tpu_custom_call.1} parent=5 // pred_check
        _
      $region10: #{tpu_custom_call.1} parent=5 // pred_check_branch
        %90 = sbr.rel (%p87) target = $region12
      $region11: #{tpu_custom_call.1} parent=5 // pred_region
        %s91 = ssub.s32 %s11, 1
        // Predicated region
        $region13: #{tpu_custom_call.1} parent=11 // pred_check
          %p92 = pneg %p49
        $region14: #{tpu_custom_call.1} parent=11 // pred_check_branch
          %94 = sbr.rel (%p92) target = $region16
        $region15: #{tpu_custom_call.1} parent=11 // pred_region
          %s96 = ssub.s32 64, 64
          %97 = vsyncadd [#allocation3], %s96
          %s98 = smul.addr %s20, 64
          %s99 = scalar_lea.hbm %s0, %s98
          %s101 = sshll.u32 [#allocation2], 4
          %s102 = int_to_ptr.vmem [resolvable:$true] %s101
          %104 = dma.hbm_to_vmem [thread:$0]  %s99, 64, %s102, [#allocation3]
        $region16: #{tpu_custom_call.1} parent=11 // pred_fallthru
          _
      $region12: #{tpu_custom_call.1} parent=5 // pred_fallthru
        _
      %p105 = scmp.lt.s32.totalorder %s11, 2
      // Predicated region
      $region17: #{tpu_custom_call.1} parent=5 // pred_check
        %p106 = pneg %p105
      $region18: #{tpu_custom_call.1} parent=5 // pred_check_branch
        %108 = sbr.rel (%p106) target = $region20
      $region19: #{tpu_custom_call.1} parent=5 // pred_region
        _
      $region20: #{tpu_custom_call.1} parent=5 // pred_fallthru
        _
      %p109 = scmp.le.s32.totalorder 1, %s11
      %p110 = scmp.lt.s32.totalorder %s11, 3
      %p111 = pnand %p109, %p110
      %p112 = pneg %p111
      // Predicated region
      $region21: #{tpu_custom_call.1} parent=5 // pred_check
        _
      $region22: #{tpu_custom_call.1} parent=5 // pred_check_branch
        %114 = sbr.rel (%p111) target = $region24
      $region23: #{tpu_custom_call.1} parent=5 // pred_region
        %s115 = ssub.s32 %s11, 1
        // Predicated region
        $region25: #{tpu_custom_call.1} parent=23 // pred_check
          %p116 = pneg %p49
        $region26: #{tpu_custom_call.1} parent=23 // pred_check_branch
          %118 = sbr.rel (%p116) target = $region28
        $region27: #{tpu_custom_call.1} parent=23 // pred_region
          %119 = dma.done [#allocation3], 64
        $region28: #{tpu_custom_call.1} parent=23 // pred_fallthru
          _
        %p120 = pneg %p49
        %p121 = pneg %p46
        %p122 = pneg %p77
        %p123 = pneg %p74
        %s124 = sand.u32 %s64, 1
        %s125 = scalar_lea.sflag [#allocation4], %s124
        %s126 = sand.u32 %s64, 1
        %s127 = smul.addr %s126, 4
        %s128 = scalar_lea.vmem [#allocation5], %s127
        %v129 = vld [vmem:[#allocation2] sm:$0xf]
        %vm130 = vcmask 125952
        %131 = vst.msk [vmem:[%s128] sm:$0xf] %vm130, %v129
        %s132 = sand.u32 %s64, 1
        %s133 = scalar_lea.sflag [#allocation4], %s132
        %s134 = sand.u32 %s64, 1
        %s135 = smul.addr %s134, 4
        %s136 = scalar_lea.vmem [#allocation5], %s135
        // Predicated region
        $region29: #{tpu_custom_call.1} parent=23 // pred_check
          %p137 = pneg %p74
        $region30: #{tpu_custom_call.1} parent=23 // pred_check_branch
          %139 = sbr.rel (%p137) target = $region32
        $region31: #{tpu_custom_call.1} parent=23 // pred_region
          %s141 = ssub.s32 64, 64
          %142 = vsyncadd %s133, %s141
          %s143 = sadd.s32 %s20, %s21
          %s144 = smul.addr %s143, 64
          %s145 = scalar_lea.hbm %s1, %s144
          %s147 = sshll.u32 %s136, 4
          %s148 = int_to_ptr.vmem [resolvable:$true] %s147
          %150 = dma.vmem_to_hbm [thread:$0]  %s148, 64, %s145, %s133
        $region32: #{tpu_custom_call.1} parent=23 // pred_fallthru
          _
      $region24: #{tpu_custom_call.1} parent=5 // pred_fallthru
        _
      %p151 = scmp.le.s32.totalorder 2, %s11
      // Predicated region
      $region33: #{tpu_custom_call.1} parent=5 // pred_check
        %p152 = pneg %p151
      $region34: #{tpu_custom_call.1} parent=5 // pred_check_branch
        %154 = sbr.rel (%p152) target = $region36
      $region35: #{tpu_custom_call.1} parent=5 // pred_region
        %s155 = ssub.s32 %s11, 2
        // Predicated region
        $region37: #{tpu_custom_call.1} parent=35 // pred_check
          %p156 = pneg %p80
        $region38: #{tpu_custom_call.1} parent=35 // pred_check_branch
          %158 = sbr.rel (%p156) target = $region40
        $region39: #{tpu_custom_call.1} parent=35 // pred_region
          %s159 = sand.u32 %s65, 1
          %s160 = scalar_lea.sflag [#allocation4], %s159
          %s161 = sand.u32 %s65, 1
          %s162 = smul.addr %s161, 4
          %s163 = scalar_lea.vmem [#allocation5], %s162
          %164 = dma.done %s160, 64
        $region40: #{tpu_custom_call.1} parent=35 // pred_fallthru
          _
      $region36: #{tpu_custom_call.1} parent=5 // pred_fallthru
        _
    $region6: #{tpu_custom_call.1} parent=1 // loop_footer
      %s15 = sadd.s32 1, %s11
    $region7: #{tpu_custom_call.1} parent=1 // loop_footer_branch
      %10 = sbr.rel target = $region3
    $region8: #{tpu_custom_call.1} parent=1 // loop_exit
      _
    %165 = vsyncpa [#allocation3], 1
    %s166 = scalar_lea.sflag [#allocation3], 1
    %167 = vsyncpa %s166, 1
    %168 = vsyncpa [#allocation4], 1
    %s169 = scalar_lea.sflag [#allocation4], 1
    %170 = vsyncpa %s169, 1

</llo_original>
